<compile_context>
chip_gen: v7x
topology: tpu7x:2x2x1
jax: 0.10.0
libtpu: 0.0.40
codegen_flags: <defaults>
</compile_context>

<pallas_src>
import math

import jax
import jax.numpy as jnp
from jax.experimental import pallas as pl
from jax.experimental.pallas import tpu as pltpu


def _make_mix_kernel(num_layers):
    """Weighted-sum kernel for a static number of layers.

    Kernel signature: (w_ref, x_0, ..., x_{L-1}, o_ref)
      w_ref : (L,) SMEM  -- gamma * softmax(scalar_parameters)
      x_l   : (tile_rows, W) VMEM block of layer l
      o_ref : (tile_rows, W) VMEM output block
    """

    def kernel(w_ref, *refs):
        x_refs = refs[:num_layers]
        o_ref = refs[num_layers]
        acc = w_ref[0] * x_refs[0][...].astype(jnp.float32)
        # L is small and static -> fully unrolled scalar-weighted accumulation.
        for l in range(1, num_layers):
            acc = acc + w_ref[l] * x_refs[l][...].astype(jnp.float32)
        o_ref[...] = acc.astype(o_ref.dtype)

    return kernel


def _default_vmem_limit_bytes():
    """Generation-aware scoped VMEM limit: ~50% of physical, capped at 64 MiB.

    -> ~64 MiB on v5e/v6e (128 MiB physical), ~32 MiB on v7x (64 MiB physical).
    """
    try:
        phys = int(pltpu.get_tpu_info().vmem_capacity_bytes)
    except Exception:
        phys = 64 << 20  # conservative fallback: assume v7x-sized VMEM
    return max(16 << 20, min(phys // 2, 64 << 20))


def _choose_lane_width(n_elems, lane_width):
    """Pick a lane-dense width (multiple of 128) that divides n_elems if possible."""
    candidates = []
    for w in (lane_width, 2048, 1024, 512, 256, 128):
        if w >= 128 and w % 128 == 0 and w not in candidates:
            candidates.append(w)
    for w in candidates:
        if n_elems % w == 0:
            return w
    # Nothing divides: use the minimum lane width so the JAX-handled tail
    # (the non-aligned remainder, < 128 elements) stays as small as possible.
    return 128


def _pick_tile_rows(rows_total, itemsize, num_layers, W, vmem_limit_bytes,
                    tile_rows_cap):
    """Biggest VMEM-safe row tile, dtype-packed, with >=4 grid steps if possible."""
    # dtype-native sublane packing: 8 (f32), 16 (bf16/f16), 32 (int8/fp8).
    sublane = max(8, 32 // max(1, itemsize))

    budget = int(vmem_limit_bytes * 0.75)
    # Double-buffered L inputs + 1 output per row of width W.
    per_row_bytes = 2 * (num_layers + 1) * itemsize * W
    max_rows_vmem = max(sublane, (budget // per_row_bytes) // sublane * sublane)

    tile = rows_total
    if tile_rows_cap is not None:
        tile = min(tile, max(sublane, int(tile_rows_cap)))
    tile = min(tile, max_rows_vmem)

    # Keep the grid at >=4 steps when there is enough work: feeds both v7x
    # TensorCores (parallel grid axis) and lets the pipeline hide the output
    # writeback tail on single-TC chips.  Per-step overhead (~0.35us) is
    # negligible at these block sizes.
    MIN_STEPS = 4
    if rows_total >= MIN_STEPS * sublane:
        tile = min(tile, max(sublane, (rows_total // MIN_STEPS) // sublane * sublane))

    if tile < rows_total:
        # Block second-to-last dim must be a multiple of the packing (>=8),
        # unless it equals the full extent (handled by the else branch).
        tile = max(sublane, (tile // sublane) * sublane)
    else:
        tile = rows_total
    return tile


def layerwise_attention(
    tensors,
    scalar_parameters,
    gamma,
    *,
    layer_transformation="softmax",
    tile_rows=None,
    lane_width=512,
    vmem_limit_bytes=None,
):
    """JAX wrapper mirroring LayerwiseAttention.forward (softmax transform)."""
    num_layers = len(tensors)
    if num_layers != int(scalar_parameters.reshape(-1).shape[0]):
        raise Exception(
            "{} tensors were passed, but the module was initialized to mix "
            "{} tensors.".format(num_layers, scalar_parameters.reshape(-1).shape[0])
        )
    if layer_transformation != "softmax":
        # TODO(synk): sparsemax/entmax layer_transformation has no Pallas port.
        raise NotImplementedError(
            "Only layer_transformation='softmax' is implemented in the Pallas "
            "kernel (got {!r}).".format(layer_transformation)
        )

    orig_shape = tuple(tensors[0].shape)
    out_dtype = tensors[0].dtype
    for idx, t in enumerate(tensors):
        if tuple(t.shape) != orig_shape or t.dtype != out_dtype:
            raise Exception(
                "Layer tensor {} has shape/dtype {}/{} but expected {}/{}."
                .format(idx, tuple(t.shape), t.dtype, orig_shape, out_dtype)
            )

    n_elems = math.prod(orig_shape)

    # Glue: softmax over the L scalar weights, gamma folded in (tiny, free).
    w = jnp.asarray(gamma, jnp.float32).reshape(()) * jax.nn.softmax(
        scalar_parameters.astype(jnp.float32).reshape(-1), axis=0
    )

    if vmem_limit_bytes is None:
        vmem_limit_bytes = _default_vmem_limit_bytes()

    flats = [t.reshape(-1) for t in tensors]

    # Lane-dense 2-D view: (rows, W) with W a multiple of 128.
    W = _choose_lane_width(n_elems, lane_width)
    rows_main = n_elems // W
    n_main = rows_main * W
    tail_len = n_elems - n_main

    if rows_main == 0:
        # Input smaller than one lane row: pure JAX mix (kernel not worth it).
        out_flat = sum(
            w[l] * flats[l].astype(jnp.float32) for l in range(num_layers)
        ).astype(out_dtype)
        return out_flat.reshape(orig_shape)

    itemsize = jnp.dtype(out_dtype).itemsize
    tile_r = _pick_tile_rows(rows_main, itemsize, num_layers, W,
                             vmem_limit_bytes, tile_rows)

    # Flat views of each layer (no pad copies); only the W-aligned prefix goes
    # through the kernel, the < W tail (rare) is mixed in plain JAX below.
    xs = []
    for f in flats:
        if tail_len:
            f = f[:n_main]
        xs.append(f.reshape(rows_main, W))

    grid = (pl.cdiv(rows_main, tile_r),)

    def layer_spec():
        return pl.BlockSpec((tile_r, W), lambda i: (i, 0))

    out2d = pl.pallas_call(
        _make_mix_kernel(num_layers),
        out_shape=jax.ShapeDtypeStruct((rows_main, W), out_dtype),
        grid_spec=pltpu.PrefetchScalarGridSpec(
            num_scalar_prefetch=0,
            grid=grid,
            in_specs=[pl.BlockSpec(memory_space=pltpu.MemorySpace.SMEM)]
            + [layer_spec() for _ in range(num_layers)],
            out_specs=layer_spec(),
        ),
        compiler_params=pltpu.CompilerParams(
            dimension_semantics=("parallel",),
            vmem_limit_bytes=int(vmem_limit_bytes),
        ),
    )(w, *xs)

    if tail_len == 0:
        return out2d.reshape(orig_shape)

    tail = sum(
        w[l] * flats[l][n_main:].astype(jnp.float32) for l in range(num_layers)
    ).astype(out_dtype)
    out_flat = jnp.concatenate([out2d.reshape(-1), tail])
    return out_flat.reshape(orig_shape)


def _reference(tensors, scalar_parameters, gamma):
    w_ref = jax.nn.softmax(scalar_parameters.astype(jnp.float32).reshape(-1))
    mix = sum(w_ref[i] * tensors[i].astype(jnp.float32) for i in range(len(tensors)))
    return (jnp.asarray(gamma, jnp.float32) * mix).astype(tensors[0].dtype)


if __name__ == "__main__":
    key = jax.random.PRNGKey(0)

    # --- Primary check: module-like small shapes (batch=2, seq=8, hidden=32) ---
    num_layers, B, S, H = 4, 2, 8, 32
    keys = jax.random.split(key, num_layers)
    tensors = [
        jax.random.normal(keys[i], (B, S, H), dtype=jnp.float32)
        for i in range(num_layers)
    ]
    scalar_parameters = jnp.arange(num_layers, dtype=jnp.float32) * 0.1
    gamma = jnp.float32(1.0)

    out = layerwise_attention(tensors, scalar_parameters, gamma)
    out = jax.block_until_ready(out)
    ref = _reference(tensors, scalar_parameters, gamma)
    assert out.shape == (B, S, H)
    assert jnp.allclose(out, ref, atol=1e-5, rtol=1e-5), "mismatch (small case)"

    # --- Multi-step grid check (exercises parallel grid / tiling path) ---
    nl2 = 3
    keys2 = jax.random.split(jax.random.PRNGKey(1), nl2)
    tensors2 = [
        jax.random.normal(keys2[i], (4, 128, 256), dtype=jnp.float32)
        for i in range(nl2)
    ]
    sp2 = jnp.linspace(-0.5, 0.5, nl2, dtype=jnp.float32)
    gamma2 = jnp.float32(1.3)
    out2 = jax.block_until_ready(layerwise_attention(tensors2, sp2, gamma2))
    ref2 = _reference(tensors2, sp2, gamma2)
    assert jnp.allclose(out2, ref2, atol=1e-5, rtol=1e-5), "mismatch (grid case)"

    # --- Non-128-divisible element count (prefix kernel + JAX tail path) ---
    nl3 = 2
    keys3 = jax.random.split(jax.random.PRNGKey(2), nl3)
    tensors3 = [
        jax.random.normal(keys3[i], (2, 7, 96), dtype=jnp.float32)
        for i in range(nl3)
    ]
    sp3 = jnp.array([0.2, -0.3], dtype=jnp.float32)
    gamma3 = jnp.float32(0.7)
    out3 = jax.block_until_ready(layerwise_attention(tensors3, sp3, gamma3))
    ref3 = _reference(tensors3, sp3, gamma3)
    assert out3.shape == (2, 7, 96)
    assert jnp.allclose(out3, ref3, atol=1e-5, rtol=1e-5), "mismatch (tail case)"

    print("KERNEL_OK")
</pallas_src>

<mosaic_0001>
module attributes {stable_mosaic.version = 11 : i64} {
  func.func @kernel(%arg0: i32, %arg1: memref<4xf32, #tpu.memory_space<smem>>, %arg2: memref<1x512xf32, #tpu.memory_space<vmem>>, %arg3: memref<1x512xf32, #tpu.memory_space<vmem>>, %arg4: memref<1x512xf32, #tpu.memory_space<vmem>>, %arg5: memref<1x512xf32, #tpu.memory_space<vmem>>, %arg6: memref<1x512xf32, #tpu.memory_space<vmem>>) attributes {dimension_semantics = [#tpu.dimension_semantics<parallel>], iteration_bounds = array<i64: 1>, scalar_prefetch = 0 : i64, scratch_operands = 0 : i64, tpu.core_type = #tpu.core_type<tc>, window_params = [{transform_indices = @transform_0, window_bounds = array<i64: 4>}, {transform_indices = @transform_1, window_bounds = array<i64: 1, 512>}, {transform_indices = @transform_2, window_bounds = array<i64: 1, 512>}, {transform_indices = @transform_3, window_bounds = array<i64: 1, 512>}, {transform_indices = @transform_4, window_bounds = array<i64: 1, 512>}, {transform_indices = @transform_5, window_bounds = array<i64: 1, 512>}]} {
    %c0 = arith.constant 0 : index
    %0 = memref.load %arg1[%c0] : memref<4xf32, #tpu.memory_space<smem>>
    %c0_0 = arith.constant 0 : index
    %c0_1 = arith.constant 0 : index
    %1 = vector.load %arg2[%c0_0, %c0_1] : memref<1x512xf32, #tpu.memory_space<vmem>>, vector<1x512xf32>
    %2 = vector.broadcast %0 : f32 to vector<1x512xf32>
    %3 = arith.mulf %2, %1 : vector<1x512xf32>
    %c1 = arith.constant 1 : index
    %4 = memref.load %arg1[%c1] : memref<4xf32, #tpu.memory_space<smem>>
    %c0_2 = arith.constant 0 : index
    %c0_3 = arith.constant 0 : index
    %5 = vector.load %arg3[%c0_2, %c0_3] : memref<1x512xf32, #tpu.memory_space<vmem>>, vector<1x512xf32>
    %6 = vector.broadcast %4 : f32 to vector<1x512xf32>
    %7 = arith.mulf %6, %5 : vector<1x512xf32>
    %8 = arith.addf %3, %7 : vector<1x512xf32>
    %c2 = arith.constant 2 : index
    %9 = memref.load %arg1[%c2] : memref<4xf32, #tpu.memory_space<smem>>
    %c0_4 = arith.constant 0 : index
    %c0_5 = arith.constant 0 : index
    %10 = vector.load %arg4[%c0_4, %c0_5] : memref<1x512xf32, #tpu.memory_space<vmem>>, vector<1x512xf32>
    %11 = vector.broadcast %9 : f32 to vector<1x512xf32>
    %12 = arith.mulf %11, %10 : vector<1x512xf32>
    %13 = arith.addf %8, %12 : vector<1x512xf32>
    %c3 = arith.constant 3 : index
    %14 = memref.load %arg1[%c3] : memref<4xf32, #tpu.memory_space<smem>>
    %c0_6 = arith.constant 0 : index
    %c0_7 = arith.constant 0 : index
    %15 = vector.load %arg5[%c0_6, %c0_7] : memref<1x512xf32, #tpu.memory_space<vmem>>, vector<1x512xf32>
    %16 = vector.broadcast %14 : f32 to vector<1x512xf32>
    %17 = arith.mulf %16, %15 : vector<1x512xf32>
    %18 = arith.addf %13, %17 : vector<1x512xf32>
    %c0_8 = arith.constant 0 : index
    %c0_9 = arith.constant 0 : index
    %19 = vector.load %arg6[%c0_8, %c0_9] : memref<1x512xf32, #tpu.memory_space<vmem>>, vector<1x512xf32>
    tpu.vector_store %arg6[%c0_8, %c0_9], %18 {strides = array<i32>} : memref<1x512xf32, #tpu.memory_space<vmem>>, vector<1x512xf32>,
    return
  }
  func.func @transform_0(%arg0: i32) -> i32 {
    %c0_i32 = arith.constant 0 : i32
    %c0_i32_0 = arith.constant 0 : i32
    return %c0_i32 : i32
  }
  func.func @transform_1(%arg0: i32) -> (i32, i32) {
    %c0_i32 = arith.constant 0 : i32
    %c0_i32_0 = arith.constant 0 : i32
    return %arg0, %c0_i32 : i32, i32
  }
  func.func @transform_2(%arg0: i32) -> (i32, i32) {
    %c0_i32 = arith.constant 0 : i32
    %c0_i32_0 = arith.constant 0 : i32
    return %arg0, %c0_i32 : i32, i32
  }
  func.func @transform_3(%arg0: i32) -> (i32, i32) {
    %c0_i32 = arith.constant 0 : i32
    %c0_i32_0 = arith.constant 0 : i32
    return %arg0, %c0_i32 : i32, i32
  }
  func.func @transform_4(%arg0: i32) -> (i32, i32) {
    %c0_i32 = arith.constant 0 : i32
    %c0_i32_0 = arith.constant 0 : i32
    return %arg0, %c0_i32 : i32, i32
  }
  func.func @transform_5(%arg0: i32) -> (i32, i32) {
    %c0_i32 = arith.constant 0 : i32
    %c0_i32_0 = arith.constant 0 : i32
    return %arg0, %c0_i32 : i32, i32
  }
}

</mosaic_0001>

<llo_original>
// kernel: tpu_custom_call.1
$region0: #{tpu_custom_call.1}
  #allocation0 [shape = 'u32[]', space=smem, size = 0x4, offset = 0x4, fixed_abs, tag = 'smem constant byte address 0x4 - core index']
  #allocation1 [shape = 'u32[144,128]{1,0:T(1,128)}', space=vmem, size = 0x12000, scoped, tag = 'internal scratch']
  %s0 = inlined_call_operand.hbm [shape: f32[4], index: 0, kind: input, shape index: {}]
  %s1 = inlined_call_operand.hbm [shape: f32[1,512], index: 1, kind: input, shape index: {}]
  %s2 = inlined_call_operand.vmem [shape: f32[1,512], index: 2, kind: input, shape index: {}]
  %s3 = inlined_call_operand.vmem [shape: f32[1,512], index: 3, kind: input, shape index: {}]
  %s4 = inlined_call_operand.vmem [shape: f32[1,512], index: 4, kind: input, shape index: {}]
  %s5 = inlined_call_operand.hbm [shape: f32[1,512], index: 5, kind: output, shape index: {}]
  %s6 = sld [smem:[#allocation0]]
  $region38: #{tpu_custom_call.1} parent=0
    _
  %s8 = ssub.s32 1, %s6
  %s9 = scalar_select 0, %s8, %s6
  $region1: #{tpu_custom_call.1} parent=0
    #allocation2 [shape = 'u8[512]{0}', space=smem, size = 0x200, scoped, tag = 'input window, operand 0, single buffered']
    #allocation3 [shape = 's32[1]{0}', space=sflag, size = 0x4, scoped, tag = 'scoped memory for tpu_custom_call.1']
    #allocation4 [shape = 's32[1]{0}', space=sflag, size = 0x4, scoped, tag = 'scoped memory for tpu_custom_call.1']
    #allocation5 [shape = 's32[1]{0}', space=sflag, size = 0x4, scoped, tag = 'scoped memory for tpu_custom_call.1']
    #allocation6 [shape = 'u8[2048]{0}', space=vmem, size = 0x800, scoped, tag = 'input window, operand 1, single buffered']
    #allocation7 [shape = 'u8[2048]{0}', space=vmem, size = 0x800, scoped, tag = 'output window, operand 0, single buffered']
    %10 = vsyncpa [#allocation5], 0
    %11 = vsyncpa [#allocation3], 0
    %12 = vsyncpa [#allocation4], 0
    // Predicated region
    $region2: #{tpu_custom_call.1} parent=1 // pred_check
      _
    $region3: #{tpu_custom_call.1} parent=1 // pred_check_branch
      %14 = sbr.rel (0) target = $region5
    $region4: #{tpu_custom_call.1} parent=1 // pred_region
      %s16 = ssub.s32 16, 16
      %17 = vsyncadd [#allocation5], %s16
      %20 = dma.hbm_to_smem %s0, 16, [#allocation2], [#allocation5]
    $region5: #{tpu_custom_call.1} parent=1 // pred_fallthru
      _
    // Predicated region
    $region6: #{tpu_custom_call.1} parent=1 // pred_check
      _
    $region7: #{tpu_custom_call.1} parent=1 // pred_check_branch
      %22 = sbr.rel (0) target = $region9
    $region8: #{tpu_custom_call.1} parent=1 // pred_region
      %s24 = ssub.s32 64, 64
      %25 = vsyncadd [#allocation3], %s24
      %s27 = sshll.u32 [#allocation6], 4
      %s28 = int_to_ptr.vmem [resolvable:$true] %s27
      %30 = dma.hbm_to_vmem [thread:$0]  %s1, 64, %s28, [#allocation3]
    $region9: #{tpu_custom_call.1} parent=1 // pred_fallthru
      _
    // Predicated region
    $region10: #{tpu_custom_call.1} parent=1 // pred_check
      _
    $region11: #{tpu_custom_call.1} parent=1 // pred_check_branch
      %32 = sbr.rel (0) target = $region13
    $region12: #{tpu_custom_call.1} parent=1 // pred_region
      _
    $region13: #{tpu_custom_call.1} parent=1 // pred_fallthru
      _
    // Predicated region
    $region14: #{tpu_custom_call.1} parent=1 // pred_check
      _
    $region15: #{tpu_custom_call.1} parent=1 // pred_check_branch
      %34 = sbr.rel (0) target = $region17
    $region16: #{tpu_custom_call.1} parent=1 // pred_region
      _
    $region17: #{tpu_custom_call.1} parent=1 // pred_fallthru
      _
    // Predicated region
    $region18: #{tpu_custom_call.1} parent=1 // pred_check
      _
    $region19: #{tpu_custom_call.1} parent=1 // pred_check_branch
      %36 = sbr.rel (0) target = $region21
    $region20: #{tpu_custom_call.1} parent=1 // pred_region
      _
    $region21: #{tpu_custom_call.1} parent=1 // pred_fallthru
      _
    // Predicated region
    $region22: #{tpu_custom_call.1} parent=1 // pred_check
      _
    $region23: #{tpu_custom_call.1} parent=1 // pred_check_branch
      %38 = sbr.rel (0) target = $region25
    $region24: #{tpu_custom_call.1} parent=1 // pred_region
      %39 = dma.done [#allocation5], 16
    $region25: #{tpu_custom_call.1} parent=1 // pred_fallthru
      _
    // Predicated region
    $region26: #{tpu_custom_call.1} parent=1 // pred_check
      _
    $region27: #{tpu_custom_call.1} parent=1 // pred_check_branch
      %41 = sbr.rel (0) target = $region29
    $region28: #{tpu_custom_call.1} parent=1 // pred_region
      %42 = dma.done [#allocation3], 64
    $region29: #{tpu_custom_call.1} parent=1 // pred_fallthru
      _
    %43 = sfence
    %s44 = sld [smem:[#allocation2]]
    %v45 = vld [vmem:[#allocation6] sm:$0xf]
    %v46 = vstv %s44
    %v47 = vmul.f32 %v46, %v45
    %s48 = sld [smem:[#allocation2 + $0x1]]
    %v49 = vld [vmem:[%s2] sm:$0xf]
    %v50 = vstv %s48
    %v51 = vmul.f32 %v50, %v49
    %v52 = vadd.f32 %v47, %v51
    %s53 = sld [smem:[#allocation2 + $0x2]]
    %v54 = vld [vmem:[%s3] sm:$0xf]
    %v55 = vstv %s53
    %v56 = vmul.f32 %v55, %v54
    %v57 = vadd.f32 %v52, %v56
    %s58 = sld [smem:[#allocation2 + $0x3]]
    %v59 = vld [vmem:[%s4] sm:$0xf]
    %v60 = vstv %s58
    %v61 = vmul.f32 %v60, %v59
    %v62 = vadd.f32 %v57, %v61
    %v63 = vlaneseq
    %vm64 = vcmp.ge.s32.totalorder %v63, 0
    %vm65 = vcmp.lt.s32.totalorder %v63, 512
    %vm66 = vmand %vm64, %vm65
    %67 = vst.msk [vmem:[#allocation7] sm:$0xf] %vm66, %v62
    // Predicated region
    $region30: #{tpu_custom_call.1} parent=1 // pred_check
      _
    $region31: #{tpu_custom_call.1} parent=1 // pred_check_branch
      %69 = sbr.rel (0) target = $region33
    $region32: #{tpu_custom_call.1} parent=1 // pred_region
      %s71 = ssub.s32 64, 64
      %72 = vsyncadd [#allocation4], %s71
      %s74 = sshll.u32 [#allocation7], 4
      %s75 = int_to_ptr.vmem [resolvable:$true] %s74
      %77 = dma.vmem_to_hbm [thread:$0]  %s75, 64, %s5, [#allocation4]
    $region33: #{tpu_custom_call.1} parent=1 // pred_fallthru
      _
    // Predicated region
    $region34: #{tpu_custom_call.1} parent=1 // pred_check
      _
    $region35: #{tpu_custom_call.1} parent=1 // pred_check_branch
      %79 = sbr.rel (0) target = $region37
    $region36: #{tpu_custom_call.1} parent=1 // pred_region
      %80 = dma.done [#allocation4], 64
    $region37: #{tpu_custom_call.1} parent=1 // pred_fallthru
      _
    %81 = vsyncpa [#allocation3], 1
    %82 = vsyncpa [#allocation4], 1
    %83 = vsyncpa [#allocation5], 1

</llo_original>
